<compile_context>
chip_gen: v7x
topology: tpu7x:2x2x1
jax: 0.10.0
libtpu: 0.0.40
codegen_flags: <defaults>
</compile_context>

<pallas_src>
import functools

import jax
import jax.numpy as jnp
import numpy as np
from jax.experimental import pallas as pl
from jax.experimental.pallas import tpu as pltpu


def _round_up(x, m):
    return ((x + m - 1) // m) * m


def _round_down(x, m):
    return (x // m) * m


def _soft_xent_kernel(preds_ref, labels_ref, out_ref, *,
                      tile_rows, total_rows, need_mask, use_mxu_rowsum):
    """One batch tile per grid step; emit an independent f32 partial sum."""
    p = preds_ref[...].astype(jnp.float32)        # (TB, C)
    lbl = labels_ref[...].astype(jnp.float32)     # (TB, C)

    if need_mask:
        # Ragged last tile: rows >= total_rows hold unspecified (possibly
        # NaN/Inf) data.  Select them to 0 in BOTH operands so every per-row
        # term is exactly 0 for invalid rows.
        row_ids = (jax.lax.broadcasted_iota(jnp.int32, (tile_rows, 1), 0)
                   + pl.program_id(0) * tile_rows)
        valid = row_ids < total_rows                               # (TB, 1)
        p = jnp.where(valid, p, 0.0)
        lbl = jnp.where(valid, lbl, 0.0)

    # Numerically-stable logsumexp over the class (lane) axis.
    m = jnp.max(p, axis=1, keepdims=True)                          # (TB, 1) XLU
    e = jnp.exp(p - m)                                             # EUP

    if use_mxu_rowsum:
        # Row sums on the (idle) MXU instead of per-row XLU lane reductions.
        C = p.shape[1]
        ones = jnp.ones((C, 128), jnp.float32)
        sum_e = jnp.dot(e, ones, preferred_element_type=jnp.float32)[:, :1]
        sum_l = jnp.dot(lbl, ones, preferred_element_type=jnp.float32)[:, :1]
    else:
        sum_e = jnp.sum(e, axis=1, keepdims=True)                  # (TB, 1)
        sum_l = jnp.sum(lbl, axis=1, keepdims=True)                # (TB, 1)

    lse = m + jnp.log(sum_e)                                       # (TB, 1)

    # sum_c(-log_softmax(p)_c * L_c) == lse * sum_c(L_c) - sum_c(p_c * L_c)
    # sum(p*lbl) is a single full-tile reduce (one XLU chain per tile).
    out_ref[0, 0] = jnp.sum(lse * sum_l) - jnp.sum(p * lbl)


@functools.partial(jax.jit, static_argnames=("reduction", "block_rows"))
def soft_cross_entropy(preds, soft_labels, reduction="average", block_rows=None):
    """Pallas implementation of SoftCrossEntropy.forward."""
    if reduction not in ("average", "sum"):
        raise ValueError(f"reduction must be 'average' or 'sum', got {reduction!r}")

    B, C = preds.shape
    itemsize = preds.dtype.itemsize

    if block_rows is None:
        # ~2 MiB of the *input dtype* per block: 2 inputs x 2 pipeline buffers
        # ~ 8 MiB + whole-tile f32 temporaries fits the 32 MiB VMEM budget below.
        target_rows = max(8, (2 * 1024 * 1024) // max(1, C * itemsize))
        block_rows = max(8, _round_down(target_rows, 8))

    TB = min(_round_up(B, 8), _round_up(int(block_rows), 8))
    # Keep >= 2 grid tiles when possible so v7x's two TensorCores both get work.
    if B > 8 and pl.cdiv(B, TB) < 2:
        TB = max(8, _round_up(pl.cdiv(B, 2), 8))

    num_tiles = pl.cdiv(B, TB)
    need_mask = (B % TB) != 0
    use_mxu_rowsum = (C % 128) == 0

    kernel = functools.partial(
        _soft_xent_kernel,
        tile_rows=TB, total_rows=B,
        need_mask=need_mask, use_mxu_rowsum=use_mxu_rowsum)

    cost = pl.CostEstimate(
        flops=5 * B * C,
        transcendentals=B * C,
        bytes_accessed=2 * B * C * itemsize + num_tiles * 4)

    partials = pl.pallas_call(
        kernel,
        out_shape=jax.ShapeDtypeStruct((num_tiles, 1), jnp.float32),
        grid_spec=pltpu.PrefetchScalarGridSpec(
            num_scalar_prefetch=0,
            grid=(num_tiles,),
            in_specs=[
                pl.BlockSpec((TB, C), lambda i: (i, 0)),
                pl.BlockSpec((TB, C), lambda i: (i, 0)),
            ],
            out_specs=pl.BlockSpec((1, 1), lambda i: (i, 0),
                                   memory_space=pltpu.MemorySpace.SMEM),
        ),
        compiler_params=pltpu.CompilerParams(
            dimension_semantics=("parallel",),
            vmem_limit_bytes=32 * 1024 * 1024),
        cost_estimate=cost,
    )(preds, soft_labels)

    loss = jnp.sum(partials)
    if reduction == "average":
        loss = loss / B
    return loss


def _reference(preds, soft_labels, reduction="average"):
    """Pure-JAX reference matching the PyTorch module."""
    p = preds.astype(jnp.float32)
    l = soft_labels.astype(jnp.float32)
    log_likelihood = -jax.nn.log_softmax(p, axis=1)
    loss = jnp.sum(log_likelihood * l)
    if reduction == "average":
        loss = loss / preds.shape[0]
    return loss


def _check(preds, soft_labels, reduction, block_rows=None, rtol=1e-4, atol=1e-4):
    out = jax.block_until_ready(
        soft_cross_entropy(preds, soft_labels, reduction=reduction,
                           block_rows=block_rows))
    ref = _reference(preds, soft_labels, reduction=reduction)
    assert np.allclose(np.asarray(out), np.asarray(ref), rtol=rtol, atol=atol), \
        (reduction, float(out), float(ref))


if __name__ == "__main__":
    key = jax.random.PRNGKey(0)

    def make_inputs(k, B, C, dtype=jnp.float32):
        k1, k2 = jax.random.split(k)
        preds = jax.random.normal(k1, (B, C), dtype=jnp.float32)
        # Gaussian-distribution-based soft labels (rows sum to 1)
        labels = jax.nn.softmax(
            jax.random.normal(k2, (B, C), dtype=jnp.float32), axis=1)
        return preds.astype(dtype), labels.astype(dtype)

    keys = jax.random.split(key, 5)

    # small, lane-aligned single-block case
    p, l = make_inputs(keys[0], 8, 128)
    _check(p, l, "average")
    _check(p, l, "sum")

    # batch not a multiple of 8 (in-kernel row-mask path)
    p, l = make_inputs(keys[1], 5, 128)
    _check(p, l, "average")
    _check(p, l, "sum")

    # multi-tile path with a ragged last tile (forced small tile)
    p, l = make_inputs(keys[2], 200, 256)
    _check(p, l, "average", block_rows=64)
    _check(p, l, "sum", block_rows=64)

    # bf16 inputs (halved HBM traffic), f32 accumulation inside the kernel
    p, l = make_inputs(keys[3], 64, 384, dtype=jnp.bfloat16)
    _check(p, l, "average")
    _check(p, l, "sum")

    # small class count not a multiple of 128 (per-row reduction fallback)
    p, l = make_inputs(keys[4], 16, 10)
    _check(p, l, "average")
    _check(p, l, "sum")

    print("KERNEL_OK")
</pallas_src>

<mosaic_0001>
module attributes {stable_mosaic.version = 11 : i64} {
  func.func @_soft_xent_kernel(%arg0: i32, %arg1: memref<8x128xf32, #tpu.memory_space<vmem>>, %arg2: memref<8x128xf32, #tpu.memory_space<vmem>>, %arg3: memref<1x1xf32, #tpu.memory_space<smem>>) attributes {dimension_semantics = [#tpu.dimension_semantics<parallel>], iteration_bounds = array<i64: 1>, scalar_prefetch = 0 : i64, scratch_operands = 0 : i64, tpu.core_type = #tpu.core_type<tc>, window_params = [{transform_indices = @transform_0, window_bounds = array<i64: 8, 128>}, {transform_indices = @transform_1, window_bounds = array<i64: 8, 128>}, {transform_indices = @transform_2, window_bounds = array<i64: 1, 1>}]} {
    %c0 = arith.constant 0 : index
    %c0_0 = arith.constant 0 : index
    %0 = vector.load %arg1[%c0, %c0_0] : memref<8x128xf32, #tpu.memory_space<vmem>>, vector<8x128xf32>
    %c0_1 = arith.constant 0 : index
    %c0_2 = arith.constant 0 : index
    %1 = vector.load %arg2[%c0_1, %c0_2] : memref<8x128xf32, #tpu.memory_space<vmem>>, vector<8x128xf32>
    %cst = arith.constant dense<0xFF800000> : vector<8xf32>
    %2 = vector.multi_reduction <maximumf>, %0, %cst [1] : vector<8x128xf32> to vector<8xf32>
    %3 = vector.shape_cast %2 : vector<8xf32> to vector<8x1xf32>
    %4 = vector.broadcast %3 : vector<8x1xf32> to vector<8x128xf32>
    %5 = arith.subf %0, %4 : vector<8x128xf32>
    %6 = math.exp %5 : vector<8x128xf32>
    %cst_3 = arith.constant 1.000000e+00 : f32
    %7 = vector.broadcast %cst_3 : f32 to vector<128x128xf32>
    %cst_4 = arith.constant dense<0.000000e+00> : vector<8x128xf32>
    %8 = tpu.matmul %6, %7, %cst_4 {dimension_numbers = #tpu.dot_dimension_numbers<[1], [0], [0], [1], [0, 0, 1, 1], [], []>} : vector<8x128xf32>, vector<128x128xf32>, vector<8x128xf32> -> vector<8x128xf32>
    %9 = vector.extract_strided_slice %8 {offsets = [0, 0], sizes = [8, 1], strides = [1, 1]} : vector<8x128xf32> to vector<8x1xf32>
    %cst_5 = arith.constant dense<0.000000e+00> : vector<8x128xf32>
    %10 = tpu.matmul %1, %7, %cst_5 {dimension_numbers = #tpu.dot_dimension_numbers<[1], [0], [0], [1], [0, 0, 1, 1], [], []>} : vector<8x128xf32>, vector<128x128xf32>, vector<8x128xf32> -> vector<8x128xf32>
    %11 = vector.extract_strided_slice %10 {offsets = [0, 0], sizes = [8, 1], strides = [1, 1]} : vector<8x128xf32> to vector<8x1xf32>
    %12 = math.log %9 : vector<8x1xf32>
    %13 = arith.addf %3, %12 : vector<8x1xf32>
    %14 = arith.mulf %13, %11 : vector<8x1xf32>
    %15 = vector.shape_cast %14 : vector<8x1xf32> to vector<1x8x1xf32>
    %cst_6 = arith.constant dense<0.000000e+00> : vector<1xf32>
    %16 = vector.multi_reduction <add>, %15, %cst_6 [1, 2] : vector<1x8x1xf32> to vector<1xf32>
    %17 = vector.shape_cast %16 : vector<1xf32> to vector<1x1x1xf32>
    %18 = vector.extract %17[0, 0, 0] : f32 from vector<1x1x1xf32>
    %19 = arith.mulf %0, %1 : vector<8x128xf32>
    %20 = vector.shape_cast %19 : vector<8x128xf32> to vector<1x8x128xf32>
    %cst_7 = arith.constant dense<0.000000e+00> : vector<1xf32>
    %21 = vector.multi_reduction <add>, %20, %cst_7 [1, 2] : vector<1x8x128xf32> to vector<1xf32>
    %22 = vector.shape_cast %21 : vector<1xf32> to vector<1x1x1xf32>
    %23 = vector.extract %22[0, 0, 0] : f32 from vector<1x1x1xf32>
    %24 = arith.subf %18, %23 : f32
    %c0_8 = arith.constant 0 : index
    %c0_9 = arith.constant 0 : index
    %25 = memref.load %arg3[%c0_8, %c0_9] : memref<1x1xf32, #tpu.memory_space<smem>>
    memref.store %24, %arg3[%c0_8, %c0_9] : memref<1x1xf32, #tpu.memory_space<smem>>
    return
  }
  func.func @transform_0(%arg0: i32) -> (i32, i32) {
    %c0_i32 = arith.constant 0 : i32
    %c0_i32_0 = arith.constant 0 : i32
    return %arg0, %c0_i32 : i32, i32
  }
  func.func @transform_1(%arg0: i32) -> (i32, i32) {
    %c0_i32 = arith.constant 0 : i32
    %c0_i32_0 = arith.constant 0 : i32
    return %arg0, %c0_i32 : i32, i32
  }
  func.func @transform_2(%arg0: i32) -> (i32, i32) {
    %c0_i32 = arith.constant 0 : i32
    %c0_i32_0 = arith.constant 0 : i32
    return %arg0, %c0_i32 : i32, i32
  }
}

</mosaic_0001>

<llo_original>
// kernel: soft_cross_entropy.1
$region0: #{soft_cross_entropy.1}
  #allocation0 [shape = 'u32[]', space=smem, size = 0x4, offset = 0x4, fixed_abs, tag = 'smem constant byte address 0x4 - core index']
  #allocation1 [shape = 'u32[144,128]{1,0:T(1,128)}', space=vmem, size = 0x12000, scoped, tag = 'internal scratch']
  %s0 = inlined_call_operand.hbm [shape: f32[8,128], index: 0, kind: input, shape index: {}]
  %s1 = inlined_call_operand.hbm [shape: f32[8,128], index: 1, kind: input, shape index: {}]
  %s2 = inlined_call_operand.hbm [shape: f32[1,1], index: 2, kind: output, shape index: {}]
  %s3 = sld [smem:[#allocation0]]
  $region26: #{soft_cross_entropy.1} parent=0
    _
  %s5 = ssub.s32 1, %s3
  %s6 = scalar_select 0, %s5, %s3
  $region1: #{soft_cross_entropy.1} parent=0
    #allocation2 [shape = 'u8[4096]{0}', space=vmem, size = 0x1000, scoped, tag = 'input window, operand 0, single buffered']
    #allocation3 [shape = 's32[1]{0}', space=sflag, size = 0x4, scoped, tag = 'scoped memory for soft_cross_entropy.1']
    #allocation4 [shape = 's32[1]{0}', space=sflag, size = 0x4, scoped, tag = 'scoped memory for soft_cross_entropy.1']
    #allocation5 [shape = 'u8[4096]{0}', space=vmem, size = 0x1000, scoped, tag = 'input window, operand 1, single buffered']
    #allocation6 [shape = 's32[1]{0}', space=sflag, size = 0x4, scoped, tag = 'scoped memory for soft_cross_entropy.1']
    #allocation7 [shape = 'u8[512]{0}', space=smem, size = 0x200, scoped, tag = 'output window, operand 0, single buffered']
    %7 = vsyncpa [#allocation3], 0
    %8 = vsyncpa [#allocation6], 0
    %9 = vsyncpa [#allocation4], 0
    // Predicated region
    $region2: #{soft_cross_entropy.1} parent=1 // pred_check
      _
    $region3: #{soft_cross_entropy.1} parent=1 // pred_check_branch
      %11 = sbr.rel (0) target = $region5
    $region4: #{soft_cross_entropy.1} parent=1 // pred_region
      %s13 = ssub.s32 128, 128
      %14 = vsyncadd [#allocation3], %s13
      %s16 = sshll.u32 [#allocation2], 4
      %s17 = int_to_ptr.vmem [resolvable:$true] %s16
      %19 = dma.hbm_to_vmem [thread:$0]  %s0, 128, %s17, [#allocation3]
    $region5: #{soft_cross_entropy.1} parent=1 // pred_fallthru
      _
    // Predicated region
    $region6: #{soft_cross_entropy.1} parent=1 // pred_check
      _
    $region7: #{soft_cross_entropy.1} parent=1 // pred_check_branch
      %21 = sbr.rel (0) target = $region9
    $region8: #{soft_cross_entropy.1} parent=1 // pred_region
      %s23 = ssub.s32 128, 128
      %24 = vsyncadd [#allocation6], %s23
      %s26 = sshll.u32 [#allocation5], 4
      %s27 = int_to_ptr.vmem [resolvable:$true] %s26
      %29 = dma.hbm_to_vmem [thread:$0]  %s1, 128, %s27, [#allocation6]
    $region9: #{soft_cross_entropy.1} parent=1 // pred_fallthru
      _
    // Predicated region
    $region10: #{soft_cross_entropy.1} parent=1 // pred_check
      _
    $region11: #{soft_cross_entropy.1} parent=1 // pred_check_branch
      %31 = sbr.rel (0) target = $region13
    $region12: #{soft_cross_entropy.1} parent=1 // pred_region
      %32 = dma.done [#allocation3], 128
    $region13: #{soft_cross_entropy.1} parent=1 // pred_fallthru
      _
    // Predicated region
    $region14: #{soft_cross_entropy.1} parent=1 // pred_check
      _
    $region15: #{soft_cross_entropy.1} parent=1 // pred_check_branch
      %34 = sbr.rel (0) target = $region17
    $region16: #{soft_cross_entropy.1} parent=1 // pred_region
      %35 = dma.done [#allocation6], 128
    $region17: #{soft_cross_entropy.1} parent=1 // pred_fallthru
      _
    %v36 = vld [vmem:[#allocation2] sm:$0xff]
    %v37 = vld [vmem:[#allocation5] sm:$0xff]
    %38 = vmax.xlane.f32.xlu0 %v36
    %v39 = vpop.xlane.xlu0 %38
    %v40 = vsub.f32 %v36, %v39
    %v41 = vmul.f32 %v40, 1.442695
    %v42 = vpow.pop %v41
    %43 = vmatprep.subr.mxu0 0.0
    %44 = vmatpush1.msra.mxu0 1.0
    %45 = vmatprep.subr.mxu0 0.0
    %46 = vmatpush1.msra.mxu0 1.0
    %47 = vmatprep.subr.mxu0 0.0
    %48 = vmatpush1.msra.mxu0 1.0
    %49 = vmatprep.subr.mxu0 0.0
    %50 = vmatpush1.msra.mxu0 1.0
    %51 = vmatprep.subr.mxu0 0.0
    %52 = vmatpush1.msra.mxu0 1.0
    %53 = vmatprep.subr.mxu0 0.0
    %54 = vmatpush1.msra.mxu0 1.0
    %55 = vmatprep.subr.mxu0 0.0
    %56 = vmatpush1.msra.mxu0 1.0
    %57 = vmatprep.subr.mxu0 0.0
    %58 = vmatpush1.msra.mxu0 1.0
    %59 = vmatprep.subr.mxu0 0.0
    %60 = vmatpush1.msra.mxu0 1.0
    %61 = vmatprep.subr.mxu0 0.0
    %62 = vmatpush1.msra.mxu0 1.0
    %63 = vmatprep.subr.mxu0 0.0
    %64 = vmatpush1.msra.mxu0 1.0
    %65 = vmatprep.subr.mxu0 0.0
    %66 = vmatpush1.msra.mxu0 1.0
    %67 = vmatprep.subr.mxu0 0.0
    %68 = vmatpush1.msra.mxu0 1.0
    %69 = vmatprep.subr.mxu0 0.0
    %70 = vmatpush1.msra.mxu0 1.0
    %71 = vmatprep.subr.mxu0 0.0
    %72 = vmatpush1.msra.mxu0 1.0
    %73 = vmatprep.subr.mxu0 0.0
    %74 = vmatpush1.msra.mxu0 1.0
    %75 = vmatprep.subr.mxu0 0.0
    %76 = vmatpush1.msra.mxu0 0.0
    %77 = vmatprep.subr.mxu0 0.0
    %78 = vmatpush1.msra.mxu0 0.0
    %79 = vmatprep.subr.mxu0 0.0
    %80 = vmatpush1.msra.mxu0 0.0
    %81 = vmatprep.subr.mxu0 0.0
    %82 = vmatpush1.msra.mxu0 0.0
    %83 = vmatprep.subr.mxu0 0.0
    %84 = vmatpush1.msra.mxu0 0.0
    %85 = vmatprep.subr.mxu0 0.0
    %86 = vmatpush1.msra.mxu0 0.0
    %87 = vmatprep.subr.mxu0 0.0
    %88 = vmatpush1.msra.mxu0 0.0
    %89 = vmatprep.subr.mxu0 0.0
    %90 = vmatpush1.msra.mxu0 0.0
    %91 = vmatprep.subr.mxu0 0.0
    %92 = vmatpush1.msra.mxu0 0.0
    %93 = vmatprep.subr.mxu0 0.0
    %94 = vmatpush1.msra.mxu0 0.0
    %95 = vmatprep.subr.mxu0 0.0
    %96 = vmatpush1.msra.mxu0 0.0
    %97 = vmatprep.subr.mxu0 0.0
    %98 = vmatpush1.msra.mxu0 0.0
    %99 = vmatprep.subr.mxu0 0.0
    %100 = vmatpush1.msra.mxu0 0.0
    %101 = vmatprep.subr.mxu0 0.0
    %102 = vmatpush1.msra.mxu0 0.0
    %103 = vmatprep.subr.mxu0 0.0
    %104 = vmatpush1.msra.mxu0 0.0
    %105 = vmatprep.subr.mxu0 0.0
    %106 = vmatpush1.msra.mxu0 0.0
    %107 = vmatprep.mubr.f32.mxu0 0.0
    %108 = vmatmul.mubr.f32.gmra.mrb[0].mxu0 %v42
    %v109 = vpop.f32.mrb[0].mxu0
    %v110 = vadd.f32 0.0, %v109
    %v111 = vpop.f32.mrb[0].mxu0
    %112 = vdwg.mxu0
    %113 = vmatprep.subr.mxu0 0.0
    %114 = vmatpush1.msra.mxu0 1.0
    %115 = vmatprep.subr.mxu0 0.0
    %116 = vmatpush1.msra.mxu0 1.0
    %117 = vmatprep.subr.mxu0 0.0
    %118 = vmatpush1.msra.mxu0 1.0
    %119 = vmatprep.subr.mxu0 0.0
    %120 = vmatpush1.msra.mxu0 1.0
    %121 = vmatprep.subr.mxu0 0.0
    %122 = vmatpush1.msra.mxu0 1.0
    %123 = vmatprep.subr.mxu0 0.0
    %124 = vmatpush1.msra.mxu0 1.0
    %125 = vmatprep.subr.mxu0 0.0
    %126 = vmatpush1.msra.mxu0 1.0
    %127 = vmatprep.subr.mxu0 0.0
    %128 = vmatpush1.msra.mxu0 1.0
    %129 = vmatprep.subr.mxu0 0.0
    %130 = vmatpush1.msra.mxu0 1.0
    %131 = vmatprep.subr.mxu0 0.0
    %132 = vmatpush1.msra.mxu0 1.0
    %133 = vmatprep.subr.mxu0 0.0
    %134 = vmatpush1.msra.mxu0 1.0
    %135 = vmatprep.subr.mxu0 0.0
    %136 = vmatpush1.msra.mxu0 1.0
    %137 = vmatprep.subr.mxu0 0.0
    %138 = vmatpush1.msra.mxu0 1.0
    %139 = vmatprep.subr.mxu0 0.0
    %140 = vmatpush1.msra.mxu0 1.0
    %141 = vmatprep.subr.mxu0 0.0
    %142 = vmatpush1.msra.mxu0 1.0
    %143 = vmatprep.subr.mxu0 0.0
    %144 = vmatpush1.msra.mxu0 1.0
    %145 = vmatprep.subr.mxu0 0.0
    %146 = vmatpush1.msra.mxu0 0.0
    %147 = vmatprep.subr.mxu0 0.0
    %148 = vmatpush1.msra.mxu0 0.0
    %149 = vmatprep.subr.mxu0 0.0
    %150 = vmatpush1.msra.mxu0 0.0
    %151 = vmatprep.subr.mxu0 0.0
    %152 = vmatpush1.msra.mxu0 0.0
    %153 = vmatprep.subr.mxu0 0.0
    %154 = vmatpush1.msra.mxu0 0.0
    %155 = vmatprep.subr.mxu0 0.0
    %156 = vmatpush1.msra.mxu0 0.0
    %157 = vmatprep.subr.mxu0 0.0
    %158 = vmatpush1.msra.mxu0 0.0
    %159 = vmatprep.subr.mxu0 0.0
    %160 = vmatpush1.msra.mxu0 0.0
    %161 = vmatprep.subr.mxu0 0.0
    %162 = vmatpush1.msra.mxu0 0.0
    %163 = vmatprep.subr.mxu0 0.0
    %164 = vmatpush1.msra.mxu0 0.0
    %165 = vmatprep.subr.mxu0 0.0
    %166 = vmatpush1.msra.mxu0 0.0
    %167 = vmatprep.subr.mxu0 0.0
    %168 = vmatpush1.msra.mxu0 0.0
    %169 = vmatprep.subr.mxu0 0.0
    %170 = vmatpush1.msra.mxu0 0.0
    %171 = vmatprep.subr.mxu0 0.0
    %172 = vmatpush1.msra.mxu0 0.0
    %173 = vmatprep.subr.mxu0 0.0
    %174 = vmatpush1.msra.mxu0 0.0
    %175 = vmatprep.subr.mxu0 0.0
    %176 = vmatpush1.msra.mxu0 0.0
    %177 = vmatprep.mubr.f32.mxu0 0.0
    %178 = vmatmul.mubr.f32.gmra.mrb[0].mxu0 %v37
    %v179 = vpop.f32.mrb[0].mxu0
    %v180 = vadd.f32 0.0, %v179
    %v181 = vpop.f32.mrb[0].mxu0
    %182 = vdwg.mxu0
    %v183 = vlog2.pop %v110
    %v184 = vmul.f32 %v183, 0.6931472
    %v185 = vadd.f32 %v39, %v184
    %v186 = vmul.f32 %v185, %v180
    %vm187 = vcmask 7168
    %v188 = vsel %vm187, %v186, 0.0
    %189 = vadd.xlane.f32.xlu0 %v188
    %v190 = vpop.xlane.xlu0 %189
    %v191 = vrot.slane %v190, 4
    %v192 = vadd.f32 %v190, %v191
    %v193 = vrot.slane %v192, 2
    %v194 = vadd.f32 %v192, %v193
    %v195 = vrot.slane %v194, 1
    %v196 = vadd.f32 %v194, %v195
    %s197 = vtos %v196
    %v198 = vmul.f32 %v36, %v37
    %199 = vadd.xlane.f32.xlu0 %v198
    %v200 = vpop.xlane.xlu0 %199
    %v201 = vrot.slane %v200, 4
    %v202 = vadd.f32 %v200, %v201
    %v203 = vrot.slane %v202, 2
    %v204 = vadd.f32 %v202, %v203
    %v205 = vrot.slane %v204, 1
    %v206 = vadd.f32 %v204, %v205
    %s207 = vtos %v206
    %s208 = ssub.f32 %s197, %s207
    %s209 = scalar_lea.smem [#allocation7], 0
    %210 = sst [smem:[%s209]] %s208
    // Predicated region
    $region18: #{soft_cross_entropy.1} parent=1 // pred_check
      _
    $region19: #{soft_cross_entropy.1} parent=1 // pred_check_branch
      %212 = sbr.rel (0) target = $region21
    $region20: #{soft_cross_entropy.1} parent=1 // pred_region
      %s214 = ssub.s32 16, 16
      %215 = vsyncadd [#allocation4], %s214
      %218 = dma.smem_to_hbm [#allocation7], 16, %s2, [#allocation4]
    $region21: #{soft_cross_entropy.1} parent=1 // pred_fallthru
      _
    // Predicated region
    $region22: #{soft_cross_entropy.1} parent=1 // pred_check
      _
    $region23: #{soft_cross_entropy.1} parent=1 // pred_check_branch
      %220 = sbr.rel (0) target = $region25
    $region24: #{soft_cross_entropy.1} parent=1 // pred_region
      %221 = dma.done [#allocation4], 16
    $region25: #{soft_cross_entropy.1} parent=1 // pred_fallthru
      _
    %222 = sfence
    %223 = vsyncpa [#allocation3], 1
    %224 = vsyncpa [#allocation6], 1
    %225 = vsyncpa [#allocation4], 1

</llo_original>
